<compile_context>
chip_gen: v6e
topology: v6e:2x2x1
jax: 0.10.0
libtpu: 0.0.40
codegen_flags: <defaults>
</compile_context>

<pallas_src>
import jax
import jax.numpy as jnp
from jax.experimental import pallas as pl
from jax.experimental.pallas import tpu as pltpu

_LANE = 128
_MIN_TILE_ROWS = 32                    # multiple of sublane packing for f32/bf16/8-bit
_TARGET_TILE_BYTES = 2 * 1024 * 1024   # per-buffer tile target (~8 MiB pipelined total)


def _tanh_scale_kernel(scale_ref, x_ref, o_ref):
    # scale_ref: SMEM (1, 1) learnable scalar parameter.
    # x_ref / o_ref: VMEM (block_rows, W) tiles in the I/O dtype.
    s = scale_ref[0, 0]
    x = x_ref[...].astype(jnp.float32)
    o_ref[...] = jnp.tanh(s * x).astype(o_ref.dtype)


def _choose_layout(n):
    """Pick a wide lane dim W (multiple of 128) and the padded flat length."""
    for w in (8 * _LANE, 4 * _LANE, 2 * _LANE, _LANE):
        if n % w == 0:
            return w, n
    # Rare fallback (flat size not a multiple of 128): pad to the widest W.
    w = 8 * _LANE
    padded = ((n + w - 1) // w) * w
    return w, padded


def trainable_hard_threshold(x, scale):
    """tanh(scale * x), elementwise, matching the PyTorch module forward."""
    orig_shape = x.shape
    if not jnp.issubdtype(x.dtype, jnp.floating):
        x = x.astype(jnp.float32)
    io_dtype = x.dtype
    n = x.size

    w, padded = _choose_layout(n)
    xf = x.reshape(-1)
    if padded != n:
        xf = jnp.pad(xf, (0, padded - n))
    rows = padded // w
    x2d = xf.reshape(rows, w)

    itemsize = jnp.dtype(io_dtype).itemsize
    tile_r = max(
        _MIN_TILE_ROWS,
        (_TARGET_TILE_BYTES // (w * itemsize)) // _MIN_TILE_ROWS * _MIN_TILE_ROWS,
    )
    if rows <= tile_r:
        block_rows = rows   # single block == full array (exempt from (8,128) rule)
        grid = (1,)
    else:
        block_rows = tile_r  # multiple of 32; ragged last block masked on writeback
        grid = (pl.cdiv(rows, tile_r),)

    scale_arr = jnp.asarray(scale, dtype=jnp.float32).reshape(1, 1)

    out2d = pl.pallas_call(
        _tanh_scale_kernel,
        out_shape=jax.ShapeDtypeStruct((rows, w), io_dtype),
        grid=grid,
        in_specs=[
            pl.BlockSpec(memory_space=pltpu.MemorySpace.SMEM),   # scale scalar
            pl.BlockSpec((block_rows, w), lambda i: (i, 0)),     # streamed tiles
        ],
        out_specs=pl.BlockSpec((block_rows, w), lambda i: (i, 0)),
        compiler_params=pltpu.CompilerParams(
            dimension_semantics=("parallel",)),
    )(scale_arr, x2d)

    if padded != n:
        out = out2d.reshape(-1)[:n].reshape(orig_shape)
    else:
        out = out2d.reshape(orig_shape)
    return out


if __name__ == "__main__":
    key = jax.random.PRNGKey(0)
    # Small NCHW input consistent with typical conv activations.
    x = jax.random.normal(key, (2, 4, 16, 16), dtype=jnp.float32)

    # Deterministic parameter init matching TrainableHardThreshold(scale=10.0).
    scale = jnp.float32(10.0)

    y = trainable_hard_threshold(x, scale)
    jax.block_until_ready(y)

    # f32 path: matches plain-JAX reference.
    y_ref = jnp.tanh(scale * x)
    assert y.shape == x.shape and y.dtype == x.dtype
    assert jnp.max(jnp.abs(y - y_ref)) < 1e-5

    # bf16 path: dtype preserved end-to-end, f32 compute inside the kernel.
    xb = x.astype(jnp.bfloat16)
    yb = trainable_hard_threshold(xb, scale)
    jax.block_until_ready(yb)
    yb_ref = jnp.tanh(scale * xb.astype(jnp.float32)).astype(jnp.bfloat16)
    assert yb.shape == xb.shape and yb.dtype == jnp.bfloat16
    assert jnp.max(jnp.abs(yb.astype(jnp.float32)
                           - yb_ref.astype(jnp.float32))) < 2e-2

    # Odd-size input exercises the (rare) padding fallback + tail slice.
    x_odd = jax.random.normal(jax.random.PRNGKey(1), (3, 5, 7), dtype=jnp.float32)
    y_odd = trainable_hard_threshold(x_odd, scale)
    jax.block_until_ready(y_odd)
    assert y_odd.shape == x_odd.shape
    assert jnp.max(jnp.abs(y_odd - jnp.tanh(scale * x_odd))) < 1e-5

    # Larger multi-tile case exercises the grid / double-buffered pipeline.
    x_big = jax.random.normal(jax.random.PRNGKey(2), (8, 64, 32, 32),
                              dtype=jnp.float32)
    y_big = trainable_hard_threshold(x_big, scale)
    jax.block_until_ready(y_big)
    assert jnp.max(jnp.abs(y_big - jnp.tanh(scale * x_big))) < 1e-5

    print("KERNEL_OK")
</pallas_src>

<mosaic_0001>
module attributes {stable_mosaic.version = 11 : i64} {
  func.func @_tanh_scale_kernel(%arg0: i32, %arg1: memref<1x1xf32, #tpu.memory_space<smem>>, %arg2: memref<2x1024xf32, #tpu.memory_space<vmem>>, %arg3: memref<2x1024xf32, #tpu.memory_space<vmem>>) attributes {dimension_semantics = [#tpu.dimension_semantics<parallel>], iteration_bounds = array<i64: 1>, scalar_prefetch = 0 : i64, scratch_operands = 0 : i64, tpu.core_type = #tpu.core_type<tc>, window_params = [{transform_indices = @transform_0, window_bounds = array<i64: 1, 1>}, {transform_indices = @transform_1, window_bounds = array<i64: 2, 1024>}, {transform_indices = @transform_2, window_bounds = array<i64: 2, 1024>}]} {
    %c0 = arith.constant 0 : index
    %c0_0 = arith.constant 0 : index
    %0 = memref.load %arg1[%c0, %c0_0] : memref<1x1xf32, #tpu.memory_space<smem>>
    %c0_1 = arith.constant 0 : index
    %c0_2 = arith.constant 0 : index
    %1 = vector.load %arg2[%c0_1, %c0_2] : memref<2x1024xf32, #tpu.memory_space<vmem>>, vector<2x1024xf32>
    %2 = vector.broadcast %0 : f32 to vector<2x1024xf32>
    %3 = arith.mulf %2, %1 : vector<2x1024xf32>
    %4 = math.tanh %3 : vector<2x1024xf32>
    %c0_3 = arith.constant 0 : index
    %c0_4 = arith.constant 0 : index
    %5 = vector.load %arg3[%c0_3, %c0_4] : memref<2x1024xf32, #tpu.memory_space<vmem>>, vector<2x1024xf32>
    tpu.vector_store %arg3[%c0_3, %c0_4], %4 {strides = array<i32>} : memref<2x1024xf32, #tpu.memory_space<vmem>>, vector<2x1024xf32>,
    return
  }
  func.func @transform_0(%arg0: i32) -> (i32, i32) {
    %c0_i32 = arith.constant 0 : i32
    %c0_i32_0 = arith.constant 0 : i32
    %c0_i32_1 = arith.constant 0 : i32
    return %c0_i32, %c0_i32_0 : i32, i32
  }
  func.func @transform_1(%arg0: i32) -> (i32, i32) {
    %c0_i32 = arith.constant 0 : i32
    %c0_i32_0 = arith.constant 0 : i32
    return %arg0, %c0_i32 : i32, i32
  }
  func.func @transform_2(%arg0: i32) -> (i32, i32) {
    %c0_i32 = arith.constant 0 : i32
    %c0_i32_0 = arith.constant 0 : i32
    return %arg0, %c0_i32 : i32, i32
  }
}

</mosaic_0001>

<llo_original>
// kernel: tpu_custom_call.1
$region0: #{tpu_custom_call.1}
  #allocation0 [shape = 'u32[]', space=smem, size = 0x4, offset = 0x4, fixed_abs, tag = 'smem constant byte address 0x4 - core index']
  #allocation1 [shape = 'u32[144,128]{1,0:T(1,128)}', space=vmem, size = 0x12000, scoped, tag = 'internal scratch']
  #allocation2 [shape = 'f32[1,1]{1,0:T(1,128)S(6)}', space=smem, size = 0x200, scoped, tag = 'scoped memory for tpu_custom_call.1']
  %s0 = inlined_call_operand.<no memory space> [shape: f32[1,1], index: 0, kind: input, shape index: {}]
  %s1 = inlined_call_operand.hbm [shape: f32[2,1024], index: 1, kind: input, shape index: {}]
  %s2 = inlined_call_operand.hbm [shape: f32[2,1024], index: 2, kind: output, shape index: {}]
  %s3 = sld [smem:[#allocation0]]
  $region22: #{tpu_custom_call.1} parent=0
    _
  %s5 = ssub.s32 1, %s3
  %s6 = scalar_select 0, %s5, %s3
  %7 = sst [smem:[#allocation2]] %s0
  $region1: #{tpu_custom_call.1} parent=0
    #allocation3 [shape = 'u8[8192]{0}', space=vmem, size = 0x2000, scoped, tag = 'input window, operand 1, single buffered']
    #allocation4 [shape = 's32[1]{0}', space=sflag, size = 0x4, scoped, tag = 'scoped memory for tpu_custom_call.1']
    #allocation5 [shape = 's32[1]{0}', space=sflag, size = 0x4, scoped, tag = 'scoped memory for tpu_custom_call.1']
    #allocation6 [shape = 'u8[8192]{0}', space=vmem, size = 0x2000, scoped, tag = 'output window, operand 0, single buffered']
    %8 = vsyncpa [#allocation4], 0
    %9 = vsyncpa [#allocation5], 0
    // Predicated region
    $region2: #{tpu_custom_call.1} parent=1 // pred_check
      _
    $region3: #{tpu_custom_call.1} parent=1 // pred_check_branch
      %11 = sbr.rel (0) target = $region5
    $region4: #{tpu_custom_call.1} parent=1 // pred_region
      _
    $region5: #{tpu_custom_call.1} parent=1 // pred_fallthru
      _
    // Predicated region
    $region6: #{tpu_custom_call.1} parent=1 // pred_check
      _
    $region7: #{tpu_custom_call.1} parent=1 // pred_check_branch
      %13 = sbr.rel (0) target = $region9
    $region8: #{tpu_custom_call.1} parent=1 // pred_region
      %s15 = ssub.s32 256, 256
      %16 = vsyncadd [#allocation4], %s15
      %s18 = sshll.u32 [#allocation3], 4
      %s19 = int_to_ptr.vmem [resolvable:$true] %s18
      %21 = dma.hbm_to_vmem [thread:$0]  %s1, 256, %s19, [#allocation4]
    $region9: #{tpu_custom_call.1} parent=1 // pred_fallthru
      _
    // Predicated region
    $region10: #{tpu_custom_call.1} parent=1 // pred_check
      _
    $region11: #{tpu_custom_call.1} parent=1 // pred_check_branch
      %23 = sbr.rel (0) target = $region13
    $region12: #{tpu_custom_call.1} parent=1 // pred_region
      %24 = dma.done [#allocation4], 256
    $region13: #{tpu_custom_call.1} parent=1 // pred_fallthru
      _
    %s25 = sld [smem:[#allocation2]]
    %v26 = vld [vmem:[#allocation3] sm:$0xff]
    %v27 = vld [vmem:[#allocation3 + $0x8] sm:$0xff]
    %v28 = vstv %s25
    %v29 = vmul.f32 %v28, %v26
    %v30 = vmul.f32 %v28, %v27
    %v31 = vtanh.pop %v29
    %v32 = vtanh.pop %v30
    %33 = vst [vmem:[#allocation6] sm:$0xff] %v31
    %34 = vst [vmem:[#allocation6 + $0x8] sm:$0xff] %v32
    // Predicated region
    $region14: #{tpu_custom_call.1} parent=1 // pred_check
      _
    $region15: #{tpu_custom_call.1} parent=1 // pred_check_branch
      %36 = sbr.rel (0) target = $region17
    $region16: #{tpu_custom_call.1} parent=1 // pred_region
      %s38 = ssub.s32 256, 256
      %39 = vsyncadd [#allocation5], %s38
      %s41 = sshll.u32 [#allocation6], 4
      %s42 = int_to_ptr.vmem [resolvable:$true] %s41
      %44 = dma.vmem_to_hbm [thread:$0]  %s42, 256, %s2, [#allocation5]
    $region17: #{tpu_custom_call.1} parent=1 // pred_fallthru
      _
    // Predicated region
    $region18: #{tpu_custom_call.1} parent=1 // pred_check
      _
    $region19: #{tpu_custom_call.1} parent=1 // pred_check_branch
      %46 = sbr.rel (0) target = $region21
    $region20: #{tpu_custom_call.1} parent=1 // pred_region
      %47 = dma.done [#allocation5], 256
    $region21: #{tpu_custom_call.1} parent=1 // pred_fallthru
      _
    %48 = vsyncpa [#allocation4], 1
    %49 = vsyncpa [#allocation5], 1

</llo_original>
